<compile_context>
chip_gen: v7x
topology: tpu7x:2x2x1
jax: 0.10.0
libtpu: 0.0.40
codegen_flags: <defaults>
</compile_context>

<pallas_src>
import jax
import jax.numpy as jnp
from jax.experimental import pallas as pl
from jax.experimental.pallas import tpu as pltpu


def _round_up(x, m):
    return ((x + m - 1) // m) * m


def mlp_kernel(x_ref,
               w1_ref, b1_ref,
               w2_ref, b2_ref,
               w3_ref, b3_ref,
               w4_ref, b4_ref,
               o_ref):
    """One batch tile: 3 MXU matmuls (f32 accumulate) + VPU tail for 8->1."""
    dt = w1_ref.dtype  # MXU operand dtype (bf16 on v6e/v7x; f32 also supported)

    x = x_ref[...].astype(dt)

    # Layer 1: (TILE_B, n_in) @ (n_in, 128)
    h = jnp.dot(x, w1_ref[...], preferred_element_type=jnp.float32) + b1_ref[...]
    h = jnp.maximum(h, 0.0)

    # Layer 2: (TILE_B, 128) @ (128, 32)
    h = jnp.dot(h.astype(dt), w2_ref[...],
                preferred_element_type=jnp.float32) + b2_ref[...]
    h = jnp.maximum(h, 0.0)

    # Layer 3: (TILE_B, 32) @ (32, 8)
    h = jnp.dot(h.astype(dt), w3_ref[...],
                preferred_element_type=jnp.float32) + b3_ref[...]
    h = jnp.maximum(h, 0.0)

    # Layer 4 (8 -> 1) on the VPU/XLU: broadcast-multiply + lane reduce.
    # An N=1 MXU matmul would use 1/128 (or 1/256) of the MXU columns.
    y = jnp.sum(h * w4_ref[...], axis=-1, keepdims=True) + b4_ref[...]

    o_ref[...] = y.astype(o_ref.dtype)


def mlp_forward(x, params, *, tile_b=None, compute_dtype=jnp.bfloat16):
    """x: (B, n_inputs) float32. params: dict of weights/biases (f32)."""
    B, n_in = x.shape

    if tile_b is None:
        # One tile for small batches; 1024-row tiles (software pipelined) for
        # large batches. Keeps 2x double-buffered x tiles + the (TILE_B,128)
        # f32 hidden activation far under the 32 MiB scoped-VMEM default
        # (and v7x's 64 MiB physical ceiling).
        tile_b = min(1024, _round_up(max(B, 8), 128))
    tile_b = _round_up(tile_b, 8)

    B_pad = _round_up(B, tile_b)
    if B_pad != B:
        x = jnp.pad(x, ((0, B_pad - B), (0, 0)))
    num_tiles = B_pad // tile_b

    # MXU operands in compute_dtype; biases stay f32 (added post-accumulation).
    # The 8->1 weight is reshaped to a (1, 8) row for the VPU tail and kept f32.
    w1 = params["w1"].astype(compute_dtype)
    w2 = params["w2"].astype(compute_dtype)
    w3 = params["w3"].astype(compute_dtype)
    w4_row = params["w4"].reshape(1, -1).astype(jnp.float32)   # (1, 8)
    b1 = params["b1"].astype(jnp.float32)
    b2 = params["b2"].astype(jnp.float32)
    b3 = params["b3"].astype(jnp.float32)
    b4 = params["b4"].reshape(1, 1).astype(jnp.float32)

    # Explicit, fixed index_maps (no late-binding closures).
    def _tiled(i):
        return (i, 0)

    def _resident(i):
        return (0, 0)

    in_specs = [
        pl.BlockSpec((tile_b, n_in), _tiled),     # x: streamed per batch tile
        pl.BlockSpec(w1.shape, _resident),        # weights/biases: VMEM-resident
        pl.BlockSpec(b1.shape, _resident),
        pl.BlockSpec(w2.shape, _resident),
        pl.BlockSpec(b2.shape, _resident),
        pl.BlockSpec(w3.shape, _resident),
        pl.BlockSpec(b3.shape, _resident),
        pl.BlockSpec(w4_row.shape, _resident),
        pl.BlockSpec(b4.shape, _resident),
    ]
    out_spec = pl.BlockSpec((tile_b, 1), _tiled)

    out = pl.pallas_call(
        mlp_kernel,
        out_shape=jax.ShapeDtypeStruct((B_pad, 1), jnp.float32),
        grid=(num_tiles,),
        in_specs=in_specs,
        out_specs=out_spec,
        compiler_params=pltpu.CompilerParams(
            dimension_semantics=("parallel",)),
    )(x, w1, b1, w2, b2, w3, b3, w4_row, b4)

    return out[:B]


def init_params(key, n_inputs):
    """Deterministic init mimicking PyTorch Linear (uniform +-1/sqrt(fan_in))."""
    dims = [(n_inputs, 128), (128, 32), (32, 8), (8, 1)]
    params = {}
    for i, (fan_in, fan_out) in enumerate(dims, start=1):
        key, kw, kb = jax.random.split(key, 3)
        bound = 1.0 / jnp.sqrt(jnp.float32(fan_in))
        params[f"w{i}"] = jax.random.uniform(
            kw, (fan_in, fan_out), jnp.float32, -bound, bound)
        # bias kept 2D (1, fan_out) for TPU-friendly broadcasting in-kernel
        params[f"b{i}"] = jax.random.uniform(
            kb, (1, fan_out), jnp.float32, -bound, bound)
    return params


def mlp_reference(x, params):
    hi = jax.lax.Precision.HIGHEST
    h = jnp.maximum(jnp.dot(x, params["w1"], precision=hi) + params["b1"], 0.0)
    h = jnp.maximum(jnp.dot(h, params["w2"], precision=hi) + params["b2"], 0.0)
    h = jnp.maximum(jnp.dot(h, params["w3"], precision=hi) + params["b3"], 0.0)
    return jnp.dot(h, params["w4"], precision=hi) + params["b4"]


if __name__ == "__main__":
    key = jax.random.PRNGKey(0)
    n_inputs = 32
    batch = 8

    key, kx = jax.random.split(key)
    x = jax.random.normal(kx, (batch, n_inputs), jnp.float32)
    params = init_params(key, n_inputs)

    ref = mlp_reference(x, params)

    # f32 MXU operands: tight check against the f32 reference.
    out_f32 = jax.block_until_ready(
        mlp_forward(x, params, compute_dtype=jnp.float32))
    assert out_f32.shape == (batch, 1)
    assert jnp.allclose(out_f32, ref, atol=1e-4, rtol=1e-4)

    # bf16 MXU operands (recommended on v6e/v7x), f32 accumulation: loose check.
    out_bf16 = jax.block_until_ready(
        mlp_forward(x, params, compute_dtype=jnp.bfloat16))
    assert out_bf16.shape == (batch, 1)
    assert jnp.allclose(out_bf16, ref, atol=3e-2, rtol=3e-2)

    print("KERNEL_OK")
</pallas_src>

<mosaic_0001>
module attributes {stable_mosaic.version = 11 : i64} {
  func.func @mlp_kernel(%arg0: i32, %arg1: memref<128x32xf32, #tpu.memory_space<vmem>>, %arg2: memref<32x128xf32, #tpu.memory_space<vmem>>, %arg3: memref<1x128xf32, #tpu.memory_space<vmem>>, %arg4: memref<128x32xf32, #tpu.memory_space<vmem>>, %arg5: memref<1x32xf32, #tpu.memory_space<vmem>>, %arg6: memref<32x8xf32, #tpu.memory_space<vmem>>, %arg7: memref<1x8xf32, #tpu.memory_space<vmem>>, %arg8: memref<1x8xf32, #tpu.memory_space<vmem>>, %arg9: memref<1x1xf32, #tpu.memory_space<vmem>>, %arg10: memref<128x1xf32, #tpu.memory_space<vmem>>) attributes {dimension_semantics = [#tpu.dimension_semantics<parallel>], iteration_bounds = array<i64: 1>, scalar_prefetch = 0 : i64, scratch_operands = 0 : i64, tpu.core_type = #tpu.core_type<tc>, window_params = [{transform_indices = @transform_0, window_bounds = array<i64: 128, 32>}, {pipeline_mode = #tpu.pipeline_mode<synchronous>, transform_indices = @transform_1, window_bounds = array<i64: 32, 128>}, {pipeline_mode = #tpu.pipeline_mode<synchronous>, transform_indices = @transform_2, window_bounds = array<i64: 1, 128>}, {pipeline_mode = #tpu.pipeline_mode<synchronous>, transform_indices = @transform_3, window_bounds = array<i64: 128, 32>}, {pipeline_mode = #tpu.pipeline_mode<synchronous>, transform_indices = @transform_4, window_bounds = array<i64: 1, 32>}, {pipeline_mode = #tpu.pipeline_mode<synchronous>, transform_indices = @transform_5, window_bounds = array<i64: 32, 8>}, {pipeline_mode = #tpu.pipeline_mode<synchronous>, transform_indices = @transform_6, window_bounds = array<i64: 1, 8>}, {pipeline_mode = #tpu.pipeline_mode<synchronous>, transform_indices = @transform_7, window_bounds = array<i64: 1, 8>}, {pipeline_mode = #tpu.pipeline_mode<synchronous>, transform_indices = @transform_8, window_bounds = array<i64: 1, 1>}, {transform_indices = @transform_9, window_bounds = array<i64: 128, 1>}]} {
    %c0 = arith.constant 0 : index
    %c0_0 = arith.constant 0 : index
    %0 = vector.load %arg1[%c0, %c0_0] : memref<128x32xf32, #tpu.memory_space<vmem>>, vector<128x32xf32>
    %c0_1 = arith.constant 0 : index
    %c0_2 = arith.constant 0 : index
    %1 = vector.load %arg2[%c0_1, %c0_2] : memref<32x128xf32, #tpu.memory_space<vmem>>, vector<32x128xf32>
    %cst = arith.constant dense<0.000000e+00> : vector<128x128xf32>
    %2 = tpu.matmul %0, %1, %cst {dimension_numbers = #tpu.dot_dimension_numbers<[1], [0], [0], [1], [0, 0, 1, 1], [], []>} : vector<128x32xf32>, vector<32x128xf32>, vector<128x128xf32> -> vector<128x128xf32>
    %c0_3 = arith.constant 0 : index
    %c0_4 = arith.constant 0 : index
    %3 = vector.load %arg3[%c0_3, %c0_4] : memref<1x128xf32, #tpu.memory_space<vmem>>, vector<1x128xf32>
    %4 = vector.broadcast %3 : vector<1x128xf32> to vector<128x128xf32>
    %5 = arith.addf %2, %4 : vector<128x128xf32>
    %cst_5 = arith.constant 0.000000e+00 : f32
    %6 = vector.broadcast %cst_5 : f32 to vector<128x128xf32>
    %7 = arith.maximumf %5, %6 : vector<128x128xf32>
    %c0_6 = arith.constant 0 : index
    %c0_7 = arith.constant 0 : index
    %8 = vector.load %arg4[%c0_6, %c0_7] : memref<128x32xf32, #tpu.memory_space<vmem>>, vector<128x32xf32>
    %cst_8 = arith.constant dense<0.000000e+00> : vector<128x32xf32>
    %9 = tpu.matmul %7, %8, %cst_8 {dimension_numbers = #tpu.dot_dimension_numbers<[1], [0], [0], [1], [0, 0, 1, 1], [], []>} : vector<128x128xf32>, vector<128x32xf32>, vector<128x32xf32> -> vector<128x32xf32>
    %c0_9 = arith.constant 0 : index
    %c0_10 = arith.constant 0 : index
    %10 = vector.load %arg5[%c0_9, %c0_10] : memref<1x32xf32, #tpu.memory_space<vmem>>, vector<1x32xf32>
    %11 = vector.broadcast %10 : vector<1x32xf32> to vector<128x32xf32>
    %12 = arith.addf %9, %11 : vector<128x32xf32>
    %cst_11 = arith.constant 0.000000e+00 : f32
    %13 = vector.broadcast %cst_11 : f32 to vector<128x32xf32>
    %14 = arith.maximumf %12, %13 : vector<128x32xf32>
    %c0_12 = arith.constant 0 : index
    %c0_13 = arith.constant 0 : index
    %15 = vector.load %arg6[%c0_12, %c0_13] : memref<32x8xf32, #tpu.memory_space<vmem>>, vector<32x8xf32>
    %cst_14 = arith.constant dense<0.000000e+00> : vector<128x8xf32>
    %16 = tpu.matmul %14, %15, %cst_14 {dimension_numbers = #tpu.dot_dimension_numbers<[1], [0], [0], [1], [0, 0, 1, 1], [], []>} : vector<128x32xf32>, vector<32x8xf32>, vector<128x8xf32> -> vector<128x8xf32>
    %c0_15 = arith.constant 0 : index
    %c0_16 = arith.constant 0 : index
    %17 = vector.load %arg7[%c0_15, %c0_16] : memref<1x8xf32, #tpu.memory_space<vmem>>, vector<1x8xf32>
    %18 = vector.broadcast %17 : vector<1x8xf32> to vector<128x8xf32>
    %19 = arith.addf %16, %18 : vector<128x8xf32>
    %cst_17 = arith.constant 0.000000e+00 : f32
    %20 = vector.broadcast %cst_17 : f32 to vector<128x8xf32>
    %21 = arith.maximumf %19, %20 : vector<128x8xf32>
    %c0_18 = arith.constant 0 : index
    %c0_19 = arith.constant 0 : index
    %22 = vector.load %arg8[%c0_18, %c0_19] : memref<1x8xf32, #tpu.memory_space<vmem>>, vector<1x8xf32>
    %23 = vector.broadcast %22 : vector<1x8xf32> to vector<128x8xf32>
    %24 = arith.mulf %21, %23 : vector<128x8xf32>
    %cst_20 = arith.constant dense<0.000000e+00> : vector<128xf32>
    %25 = vector.multi_reduction <add>, %24, %cst_20 [1] : vector<128x8xf32> to vector<128xf32>
    %26 = vector.shape_cast %25 : vector<128xf32> to vector<128x1xf32>
    %c0_21 = arith.constant 0 : index
    %c0_22 = arith.constant 0 : index
    %27 = vector.load %arg9[%c0_21, %c0_22] : memref<1x1xf32, #tpu.memory_space<vmem>>, vector<1x1xf32>
    %28 = vector.broadcast %27 : vector<1x1xf32> to vector<128x1xf32>
    %29 = arith.addf %26, %28 : vector<128x1xf32>
    %c0_23 = arith.constant 0 : index
    %c0_24 = arith.constant 0 : index
    %30 = vector.load %arg10[%c0_23, %c0_24] : memref<128x1xf32, #tpu.memory_space<vmem>>, vector<128x1xf32>
    tpu.vector_store %arg10[%c0_23, %c0_24], %29 {strides = array<i32>} : memref<128x1xf32, #tpu.memory_space<vmem>>, vector<128x1xf32>,
    return
  }
  func.func @transform_0(%arg0: i32) -> (i32, i32) {
    %c0_i32 = arith.constant 0 : i32
    %c0_i32_0 = arith.constant 0 : i32
    return %arg0, %c0_i32 : i32, i32
  }
  func.func @transform_1(%arg0: i32) -> (i32, i32) {
    %c0_i32 = arith.constant 0 : i32
    %c0_i32_0 = arith.constant 0 : i32
    %c0_i32_1 = arith.constant 0 : i32
    return %c0_i32, %c0_i32_0 : i32, i32
  }
  func.func @transform_2(%arg0: i32) -> (i32, i32) {
    %c0_i32 = arith.constant 0 : i32
    %c0_i32_0 = arith.constant 0 : i32
    %c0_i32_1 = arith.constant 0 : i32
    return %c0_i32, %c0_i32_0 : i32, i32
  }
  func.func @transform_3(%arg0: i32) -> (i32, i32) {
    %c0_i32 = arith.constant 0 : i32
    %c0_i32_0 = arith.constant 0 : i32
    %c0_i32_1 = arith.constant 0 : i32
    return %c0_i32, %c0_i32_0 : i32, i32
  }
  func.func @transform_4(%arg0: i32) -> (i32, i32) {
    %c0_i32 = arith.constant 0 : i32
    %c0_i32_0 = arith.constant 0 : i32
    %c0_i32_1 = arith.constant 0 : i32
    return %c0_i32, %c0_i32_0 : i32, i32
  }
  func.func @transform_5(%arg0: i32) -> (i32, i32) {
    %c0_i32 = arith.constant 0 : i32
    %c0_i32_0 = arith.constant 0 : i32
    %c0_i32_1 = arith.constant 0 : i32
    return %c0_i32, %c0_i32_0 : i32, i32
  }
  func.func @transform_6(%arg0: i32) -> (i32, i32) {
    %c0_i32 = arith.constant 0 : i32
    %c0_i32_0 = arith.constant 0 : i32
    %c0_i32_1 = arith.constant 0 : i32
    return %c0_i32, %c0_i32_0 : i32, i32
  }
  func.func @transform_7(%arg0: i32) -> (i32, i32) {
    %c0_i32 = arith.constant 0 : i32
    %c0_i32_0 = arith.constant 0 : i32
    %c0_i32_1 = arith.constant 0 : i32
    return %c0_i32, %c0_i32_0 : i32, i32
  }
  func.func @transform_8(%arg0: i32) -> (i32, i32) {
    %c0_i32 = arith.constant 0 : i32
    %c0_i32_0 = arith.constant 0 : i32
    %c0_i32_1 = arith.constant 0 : i32
    return %c0_i32, %c0_i32_0 : i32, i32
  }
  func.func @transform_9(%arg0: i32) -> (i32, i32) {
    %c0_i32 = arith.constant 0 : i32
    %c0_i32_0 = arith.constant 0 : i32
    return %arg0, %c0_i32 : i32, i32
  }
}

</mosaic_0001>

<llo_original>
// kernel: tpu_custom_call.1
$region0: #{tpu_custom_call.1}
  #allocation0 [shape = 'u32[]', space=smem, size = 0x4, offset = 0x4, fixed_abs, tag = 'smem constant byte address 0x4 - core index']
  #allocation1 [shape = 'u32[144,128]{1,0:T(1,128)}', space=vmem, size = 0x12000, scoped, tag = 'internal scratch']
  #allocation2 [shape = 'f32[1,1]{1,0:T(1,128)S(1)}', space=vmem, size = 0x200, scoped, tag = 'scoped memory for tpu_custom_call.1']
  %s0 = inlined_call_operand.vmem [shape: f32[128,32], index: 0, kind: input, shape index: {}]
  %s1 = inlined_call_operand.vmem [shape: f32[32,128], index: 1, kind: input, shape index: {}]
  %s2 = inlined_call_operand.vmem [shape: f32[1,128], index: 2, kind: input, shape index: {}]
  %s3 = inlined_call_operand.vmem [shape: f32[128,32], index: 3, kind: input, shape index: {}]
  %s4 = inlined_call_operand.vmem [shape: f32[1,32], index: 4, kind: input, shape index: {}]
  %s5 = inlined_call_operand.vmem [shape: f32[32,8], index: 5, kind: input, shape index: {}]
  %s6 = inlined_call_operand.vmem [shape: f32[1,8], index: 6, kind: input, shape index: {}]
  %s7 = inlined_call_operand.vmem [shape: f32[1,8], index: 7, kind: input, shape index: {}]
  %s8 = inlined_call_operand.<no memory space> [shape: f32[1,1], index: 8, kind: input, shape index: {}]
  %s9 = inlined_call_operand.vmem [shape: f32[128,1], index: 9, kind: output, shape index: {}]
  %s10 = sld [smem:[#allocation0]]
  $region46: #{tpu_custom_call.1} parent=0
    _
  %s12 = ssub.s32 1, %s10
  %s13 = scalar_select 0, %s12, %s10
  %v14 = vstv %s8
  %15 = vst [vmem:[#allocation2] sm:$0x1] %v14
  // Predicated region
  $region2: #{tpu_custom_call.1} parent=0 // pred_check
    _
  $region3: #{tpu_custom_call.1} parent=0 // pred_check_branch
    %17 = sbr.rel (0) target = $region5
  $region4: #{tpu_custom_call.1} parent=0 // pred_region
    _
  $region5: #{tpu_custom_call.1} parent=0 // pred_fallthru
    _
  // Predicated region
  $region6: #{tpu_custom_call.1} parent=0 // pred_check
    _
  $region7: #{tpu_custom_call.1} parent=0 // pred_check_branch
    %19 = sbr.rel (0) target = $region9
  $region8: #{tpu_custom_call.1} parent=0 // pred_region
    _
  $region9: #{tpu_custom_call.1} parent=0 // pred_fallthru
    _
  // Predicated region
  $region10: #{tpu_custom_call.1} parent=0 // pred_check
    _
  $region11: #{tpu_custom_call.1} parent=0 // pred_check_branch
    %21 = sbr.rel (0) target = $region13
  $region12: #{tpu_custom_call.1} parent=0 // pred_region
    _
  $region13: #{tpu_custom_call.1} parent=0 // pred_fallthru
    _
  // Predicated region
  $region14: #{tpu_custom_call.1} parent=0 // pred_check
    _
  $region15: #{tpu_custom_call.1} parent=0 // pred_check_branch
    %23 = sbr.rel (0) target = $region17
  $region16: #{tpu_custom_call.1} parent=0 // pred_region
    _
  $region17: #{tpu_custom_call.1} parent=0 // pred_fallthru
    _
  // Predicated region
  $region18: #{tpu_custom_call.1} parent=0 // pred_check
    _
  $region19: #{tpu_custom_call.1} parent=0 // pred_check_branch
    %25 = sbr.rel (0) target = $region21
  $region20: #{tpu_custom_call.1} parent=0 // pred_region
    _
  $region21: #{tpu_custom_call.1} parent=0 // pred_fallthru
    _
  // Predicated region
  $region22: #{tpu_custom_call.1} parent=0 // pred_check
    _
  $region23: #{tpu_custom_call.1} parent=0 // pred_check_branch
    %27 = sbr.rel (0) target = $region25
  $region24: #{tpu_custom_call.1} parent=0 // pred_region
    _
  $region25: #{tpu_custom_call.1} parent=0 // pred_fallthru
    _
  // Predicated region
  $region26: #{tpu_custom_call.1} parent=0 // pred_check
    _
  $region27: #{tpu_custom_call.1} parent=0 // pred_check_branch
    %29 = sbr.rel (0) target = $region29
  $region28: #{tpu_custom_call.1} parent=0 // pred_region
    _
  $region29: #{tpu_custom_call.1} parent=0 // pred_fallthru
    _
  // Predicated region
  $region30: #{tpu_custom_call.1} parent=0 // pred_check
    _
  $region31: #{tpu_custom_call.1} parent=0 // pred_check_branch
    %31 = sbr.rel (0) target = $region33
  $region32: #{tpu_custom_call.1} parent=0 // pred_region
    _
  $region33: #{tpu_custom_call.1} parent=0 // pred_fallthru
    _
  // Predicated region
  $region34: #{tpu_custom_call.1} parent=0 // pred_check
    _
  $region35: #{tpu_custom_call.1} parent=0 // pred_check_branch
    %33 = sbr.rel (0) target = $region37
  $region36: #{tpu_custom_call.1} parent=0 // pred_region
    _
  $region37: #{tpu_custom_call.1} parent=0 // pred_fallthru
    _
  %v34 = vld [vmem:[%s0] sm:$0xff]
  %v35 = vld [vmem:[%s0 + $0x8] sm:$0xff]
  %v36 = vld [vmem:[%s0 + $0x10] sm:$0xff]
  %v37 = vld [vmem:[%s0 + $0x18] sm:$0xff]
  %v38 = vld [vmem:[%s0 + $0x20] sm:$0xff]
  %v39 = vld [vmem:[%s0 + $0x28] sm:$0xff]
  %v40 = vld [vmem:[%s0 + $0x30] sm:$0xff]
  %v41 = vld [vmem:[%s0 + $0x38] sm:$0xff]
  %v42 = vld [vmem:[%s0 + $0x40] sm:$0xff]
  %v43 = vld [vmem:[%s0 + $0x48] sm:$0xff]
  %v44 = vld [vmem:[%s0 + $0x50] sm:$0xff]
  %v45 = vld [vmem:[%s0 + $0x58] sm:$0xff]
  %v46 = vld [vmem:[%s0 + $0x60] sm:$0xff]
  %v47 = vld [vmem:[%s0 + $0x68] sm:$0xff]
  %v48 = vld [vmem:[%s0 + $0x70] sm:$0xff]
  %v49 = vld [vmem:[%s0 + $0x78] sm:$0xff]
  %v50 = vld [vmem:[%s1] sm:$0xff]
  %v51 = vld [vmem:[%s1 + $0x8] sm:$0xff]
  %v52 = vld [vmem:[%s1 + $0x10] sm:$0xff]
  %v53 = vld [vmem:[%s1 + $0x18] sm:$0xff]
  %v54 = vld [vmem:[%s2] sm:$0x1]
  %v56 = vlaneseq
  %v57 = vshrl.u32 %v56, 7
  %v58 = vsub.s32 0, %v57
  %v59 = vrot.slane %v54, %v58
  %vm61 = vcmask 261120
  %v63 = vsel %vm61, %v34, 0
  %v66 = vsel %vm61, %v35, 0
  %v69 = vsel %vm61, %v36, 0
  %v72 = vsel %vm61, %v37, 0
  %v75 = vsel %vm61, %v38, 0
  %v78 = vsel %vm61, %v39, 0
  %v81 = vsel %vm61, %v40, 0
  %v84 = vsel %vm61, %v41, 0
  %v87 = vsel %vm61, %v42, 0
  %v90 = vsel %vm61, %v43, 0
  %v93 = vsel %vm61, %v44, 0
  %v96 = vsel %vm61, %v45, 0
  %v99 = vsel %vm61, %v46, 0
  %v102 = vsel %vm61, %v47, 0
  %v105 = vsel %vm61, %v48, 0
  %v108 = vsel %vm61, %v49, 0
  %110 = vmatprep.subr.mxu0 0.0
  %111 = vmatpush1.msra.mxu0 %v50
  %112 = vmatprep.subr.mxu0 0.0
  %113 = vmatpush1.msra.mxu0 %v51
  %114 = vmatprep.subr.mxu0 0.0
  %115 = vmatpush1.msra.mxu0 %v52
  %116 = vmatprep.subr.mxu0 0.0
  %117 = vmatpush1.msra.mxu0 %v53
  %118 = vmatprep.subr.mxu0 0.0
  %119 = vmatpush1.msra.mxu0 0.0
  %120 = vmatprep.subr.mxu0 0.0
  %121 = vmatpush1.msra.mxu0 0.0
  %122 = vmatprep.subr.mxu0 0.0
  %123 = vmatpush1.msra.mxu0 0.0
  %124 = vmatprep.subr.mxu0 0.0
  %125 = vmatpush1.msra.mxu0 0.0
  %126 = vmatprep.subr.mxu0 0.0
  %127 = vmatpush1.msra.mxu0 0.0
  %128 = vmatprep.subr.mxu0 0.0
  %129 = vmatpush1.msra.mxu0 0.0
  %130 = vmatprep.subr.mxu0 0.0
  %131 = vmatpush1.msra.mxu0 0.0
  %132 = vmatprep.subr.mxu0 0.0
  %133 = vmatpush1.msra.mxu0 0.0
  %134 = vmatprep.subr.mxu0 0.0
  %135 = vmatpush1.msra.mxu0 0.0
  %136 = vmatprep.subr.mxu0 0.0
  %137 = vmatpush1.msra.mxu0 0.0
  %138 = vmatprep.subr.mxu0 0.0
  %139 = vmatpush1.msra.mxu0 0.0
  %140 = vmatprep.subr.mxu0 0.0
  %141 = vmatpush1.msra.mxu0 0.0
  %142 = vmatprep.subr.mxu0 0.0
  %143 = vmatpush1.msra.mxu0 0.0
  %144 = vmatprep.subr.mxu0 0.0
  %145 = vmatpush1.msra.mxu0 0.0
  %146 = vmatprep.subr.mxu0 0.0
  %147 = vmatpush1.msra.mxu0 0.0
  %148 = vmatprep.subr.mxu0 0.0
  %149 = vmatpush1.msra.mxu0 0.0
  %150 = vmatprep.subr.mxu0 0.0
  %151 = vmatpush1.msra.mxu0 0.0
  %152 = vmatprep.subr.mxu0 0.0
  %153 = vmatpush1.msra.mxu0 0.0
  %154 = vmatprep.subr.mxu0 0.0
  %155 = vmatpush1.msra.mxu0 0.0
  %156 = vmatprep.subr.mxu0 0.0
  %157 = vmatpush1.msra.mxu0 0.0
  %158 = vmatprep.subr.mxu0 0.0
  %159 = vmatpush1.msra.mxu0 0.0
  %160 = vmatprep.subr.mxu0 0.0
  %161 = vmatpush1.msra.mxu0 0.0
  %162 = vmatprep.subr.mxu0 0.0
  %163 = vmatpush1.msra.mxu0 0.0
  %164 = vmatprep.subr.mxu0 0.0
  %165 = vmatpush1.msra.mxu0 0.0
  %166 = vmatprep.subr.mxu0 0.0
  %167 = vmatpush1.msra.mxu0 0.0
  %168 = vmatprep.subr.mxu0 0.0
  %169 = vmatpush1.msra.mxu0 0.0
  %170 = vmatprep.subr.mxu0 0.0
  %171 = vmatpush1.msra.mxu0 0.0
  %172 = vmatprep.subr.mxu0 0.0
  %173 = vmatpush1.msra.mxu0 0.0
  %174 = vmatprep.mubr.f32.mxu0 0.0
  %175 = vmatmul.mubr.f32.gmra.mrb[0].mxu0 %v63
  %v176 = vpop.f32.mrb[0].mxu0
  %v177 = vadd.f32 %v59, %v176
  %v178 = vpop.f32.mrb[0].mxu0
  %179 = vmatprep.mubr.f32.mxu0 0.0
  %180 = vmatmul.mubr.f32.gmra.mrb[0].mxu0 %v66
  %v181 = vpop.f32.mrb[0].mxu0
  %v182 = vadd.f32 %v59, %v181
  %v183 = vpop.f32.mrb[0].mxu0
  %184 = vmatprep.mubr.f32.mxu0 0.0
  %185 = vmatmul.mubr.f32.gmra.mrb[0].mxu0 %v69
  %v186 = vpop.f32.mrb[0].mxu0
  %v187 = vadd.f32 %v59, %v186
  %v188 = vpop.f32.mrb[0].mxu0
  %189 = vmatprep.mubr.f32.mxu0 0.0
  %190 = vmatmul.mubr.f32.gmra.mrb[0].mxu0 %v72
  %v191 = vpop.f32.mrb[0].mxu0
  %v192 = vadd.f32 %v59, %v191
  %v193 = vpop.f32.mrb[0].mxu0
  %194 = vmatprep.mubr.f32.mxu0 0.0
  %195 = vmatmul.mubr.f32.gmra.mrb[0].mxu0 %v75
  %v196 = vpop.f32.mrb[0].mxu0
  %v197 = vadd.f32 %v59, %v196
  %v198 = vpop.f32.mrb[0].mxu0
  %199 = vmatprep.mubr.f32.mxu0 0.0
  %200 = vmatmul.mubr.f32.gmra.mrb[0].mxu0 %v78
  %v201 = vpop.f32.mrb[0].mxu0
  %v202 = vadd.f32 %v59, %v201
  %v203 = vpop.f32.mrb[0].mxu0
  %204 = vmatprep.mubr.f32.mxu0 0.0
  %205 = vmatmul.mubr.f32.gmra.mrb[0].mxu0 %v81
  %v206 = vpop.f32.mrb[0].mxu0
  %v207 = vadd.f32 %v59, %v206
  %v208 = vpop.f32.mrb[0].mxu0
  %209 = vmatprep.mubr.f32.mxu0 0.0
  %210 = vmatmul.mubr.f32.gmra.mrb[0].mxu0 %v84
  %v211 = vpop.f32.mrb[0].mxu0
  %v212 = vadd.f32 %v59, %v211
  %v213 = vpop.f32.mrb[0].mxu0
  %214 = vmatprep.mubr.f32.mxu0 0.0
  %215 = vmatmul.mubr.f32.gmra.mrb[0].mxu0 %v87
  %v216 = vpop.f32.mrb[0].mxu0
  %v217 = vadd.f32 %v59, %v216
  %v218 = vpop.f32.mrb[0].mxu0
  %219 = vmatprep.mubr.f32.mxu0 0.0
  %220 = vmatmul.mubr.f32.gmra.mrb[0].mxu0 %v90
  %v221 = vpop.f32.mrb[0].mxu0
  %v222 = vadd.f32 %v59, %v221
  %v223 = vpop.f32.mrb[0].mxu0
  %224 = vmatprep.mubr.f32.mxu0 0.0
  %225 = vmatmul.mubr.f32.gmra.mrb[0].mxu0 %v93
  %v226 = vpop.f32.mrb[0].mxu0
  %v227 = vadd.f32 %v59, %v226
  %v228 = vpop.f32.mrb[0].mxu0
  %229 = vmatprep.mubr.f32.mxu0 0.0
  %230 = vmatmul.mubr.f32.gmra.mrb[0].mxu0 %v96
  %v231 = vpop.f32.mrb[0].mxu0
  %v232 = vadd.f32 %v59, %v231
  %v233 = vpop.f32.mrb[0].mxu0
  %234 = vmatprep.mubr.f32.mxu0 0.0
  %235 = vmatmul.mubr.f32.gmra.mrb[0].mxu0 %v99
  %v236 = vpop.f32.mrb[0].mxu0
  %v237 = vadd.f32 %v59, %v236
  %v238 = vpop.f32.mrb[0].mxu0
  %239 = vmatprep.mubr.f32.mxu0 0.0
  %240 = vmatmul.mubr.f32.gmra.mrb[0].mxu0 %v102
  %v241 = vpop.f32.mrb[0].mxu0
  %v242 = vadd.f32 %v59, %v241
  %v243 = vpop.f32.mrb[0].mxu0
  %244 = vmatprep.mubr.f32.mxu0 0.0
  %245 = vmatmul.mubr.f32.gmra.mrb[0].mxu0 %v105
  %v246 = vpop.f32.mrb[0].mxu0
  %v247 = vadd.f32 %v59, %v246
  %v248 = vpop.f32.mrb[0].mxu0
  %249 = vmatprep.mubr.f32.mxu0 0.0
  %250 = vmatmul.mubr.f32.gmra.mrb[0].mxu0 %v108
  %v251 = vpop.f32.mrb[0].mxu0
  %v252 = vadd.f32 %v59, %v251
  %v253 = vpop.f32.mrb[0].mxu0
  %254 = vdwg.mxu0
  %v255 = vmax.f32 %v177, 0.0
  %v256 = vmax.f32 %v182, 0.0
  %v257 = vmax.f32 %v187, 0.0
  %v258 = vmax.f32 %v192, 0.0
  %v259 = vmax.f32 %v197, 0.0
  %v260 = vmax.f32 %v202, 0.0
  %v261 = vmax.f32 %v207, 0.0
  %v262 = vmax.f32 %v212, 0.0
  %v263 = vmax.f32 %v217, 0.0
  %v264 = vmax.f32 %v222, 0.0
  %v265 = vmax.f32 %v227, 0.0
  %v266 = vmax.f32 %v232, 0.0
  %v267 = vmax.f32 %v237, 0.0
  %v268 = vmax.f32 %v242, 0.0
  %v269 = vmax.f32 %v247, 0.0
  %v270 = vmax.f32 %v252, 0.0
  %v271 = vld [vmem:[%s3] sm:$0xff]
  %v272 = vld [vmem:[%s3 + $0x8] sm:$0xff]
  %v273 = vld [vmem:[%s3 + $0x10] sm:$0xff]
  %v274 = vld [vmem:[%s3 + $0x18] sm:$0xff]
  %v275 = vld [vmem:[%s3 + $0x20] sm:$0xff]
  %v276 = vld [vmem:[%s3 + $0x28] sm:$0xff]
  %v277 = vld [vmem:[%s3 + $0x30] sm:$0xff]
  %v278 = vld [vmem:[%s3 + $0x38] sm:$0xff]
  %v279 = vld [vmem:[%s3 + $0x40] sm:$0xff]
  %v280 = vld [vmem:[%s3 + $0x48] sm:$0xff]
  %v281 = vld [vmem:[%s3 + $0x50] sm:$0xff]
  %v282 = vld [vmem:[%s3 + $0x58] sm:$0xff]
  %v283 = vld [vmem:[%s3 + $0x60] sm:$0xff]
  %v284 = vld [vmem:[%s3 + $0x68] sm:$0xff]
  %v285 = vld [vmem:[%s3 + $0x70] sm:$0xff]
  %v286 = vld [vmem:[%s3 + $0x78] sm:$0xff]
  %v287 = vld [vmem:[%s4] sm:$0x1]
  %v289 = vlaneseq
  %v290 = vshrl.u32 %v289, 7
  %v291 = vsub.s32 0, %v290
  %v292 = vrot.slane %v287, %v291
  %294 = vmatprep.subr.mxu0 0.0
  %295 = vmatpush1.msra.mxu0 %v271
  %296 = vmatprep.subr.mxu0 0.0
  %297 = vmatpush1.msra.mxu0 %v272
  %298 = vmatprep.subr.mxu0 0.0
  %299 = vmatpush1.msra.mxu0 %v273
  %300 = vmatprep.subr.mxu0 0.0
  %301 = vmatpush1.msra.mxu0 %v274
  %302 = vmatprep.subr.mxu0 0.0
  %303 = vmatpush1.msra.mxu0 %v275
  %304 = vmatprep.subr.mxu0 0.0
  %305 = vmatpush1.msra.mxu0 %v276
  %306 = vmatprep.subr.mxu0 0.0
  %307 = vmatpush1.msra.mxu0 %v277
  %308 = vmatprep.subr.mxu0 0.0
  %309 = vmatpush1.msra.mxu0 %v278
  %310 = vmatprep.subr.mxu0 0.0
  %311 = vmatpush1.msra.mxu0 %v279
  %312 = vmatprep.subr.mxu0 0.0
  %313 = vmatpush1.msra.mxu0 %v280
  %314 = vmatprep.subr.mxu0 0.0
  %315 = vmatpush1.msra.mxu0 %v281
  %316 = vmatprep.subr.mxu0 0.0
  %317 = vmatpush1.msra.mxu0 %v282
  %318 = vmatprep.subr.mxu0 0.0
  %319 = vmatpush1.msra.mxu0 %v283
  %320 = vmatprep.subr.mxu0 0.0
  %321 = vmatpush1.msra.mxu0 %v284
  %322 = vmatprep.subr.mxu0 0.0
  %323 = vmatpush1.msra.mxu0 %v285
  %324 = vmatprep.subr.mxu0 0.0
  %325 = vmatpush1.msra.mxu0 %v286
  %326 = vmatprep.subr.mxu0 0.0
  %327 = vmatpush1.msra.mxu0 0.0
  %328 = vmatprep.subr.mxu0 0.0
  %329 = vmatpush1.msra.mxu0 0.0
  %330 = vmatprep.subr.mxu0 0.0
  %331 = vmatpush1.msra.mxu0 0.0
  %332 = vmatprep.subr.mxu0 0.0
  %333 = vmatpush1.msra.mxu0 0.0
  %334 = vmatprep.subr.mxu0 0.0
  %335 = vmatpush1.msra.mxu0 0.0
  %336 = vmatprep.subr.mxu0 0.0
  %337 = vmatpush1.msra.mxu0 0.0
  %338 = vmatprep.subr.mxu0 0.0
  %339 = vmatpush1.msra.mxu0 0.0
  %340 = vmatprep.subr.mxu0 0.0
  %341 = vmatpush1.msra.mxu0 0.0
  %342 = vmatprep.subr.mxu0 0.0
  %343 = vmatpush1.msra.mxu0 0.0
  %344 = vmatprep.subr.mxu0 0.0
  %345 = vmatpush1.msra.mxu0 0.0
  %346 = vmatprep.subr.mxu0 0.0
  %347 = vmatpush1.msra.mxu0 0.0
  %348 = vmatprep.subr.mxu0 0.0
  %349 = vmatpush1.msra.mxu0 0.0
  %350 = vmatprep.subr.mxu0 0.0
  %351 = vmatpush1.msra.mxu0 0.0
  %352 = vmatprep.subr.mxu0 0.0
  %353 = vmatpush1.msra.mxu0 0.0
  %354 = vmatprep.subr.mxu0 0.0
  %355 = vmatpush1.msra.mxu0 0.0
  %356 = vmatprep.subr.mxu0 0.0
  %357 = vmatpush1.msra.mxu0 0.0
  %358 = vmatprep.mubr.f32.mxu0 0.0
  %359 = vmatmul.mubr.f32.gmra.mrb[0].mxu0 %v255
  %v360 = vpop.f32.mrb[0].mxu0
  %v361 = vadd.f32 %v292, %v360
  %v362 = vpop.f32.mrb[0].mxu0
  %363 = vmatprep.mubr.f32.mxu0 0.0
  %364 = vmatmul.mubr.f32.gmra.mrb[0].mxu0 %v256
  %v365 = vpop.f32.mrb[0].mxu0
  %v366 = vadd.f32 %v292, %v365
  %v367 = vpop.f32.mrb[0].mxu0
  %368 = vmatprep.mubr.f32.mxu0 0.0
  %369 = vmatmul.mubr.f32.gmra.mrb[0].mxu0 %v257
  %v370 = vpop.f32.mrb[0].mxu0
  %v371 = vadd.f32 %v292, %v370
  %v372 = vpop.f32.mrb[0].mxu0
  %373 = vmatprep.mubr.f32.mxu0 0.0
  %374 = vmatmul.mubr.f32.gmra.mrb[0].mxu0 %v258
  %v375 = vpop.f32.mrb[0].mxu0
  %v376 = vadd.f32 %v292, %v375
  %v377 = vpop.f32.mrb[0].mxu0
  %378 = vmatprep.mubr.f32.mxu0 0.0
  %379 = vmatmul.mubr.f32.gmra.mrb[0].mxu0 %v259
  %v380 = vpop.f32.mrb[0].mxu0
  %v381 = vadd.f32 %v292, %v380
  %v382 = vpop.f32.mrb[0].mxu0
  %383 = vmatprep.mubr.f32.mxu0 0.0
  %384 = vmatmul.mubr.f32.gmra.mrb[0].mxu0 %v260
  %v385 = vpop.f32.mrb[0].mxu0
  %v386 = vadd.f32 %v292, %v385
  %v387 = vpop.f32.mrb[0].mxu0
  %388 = vmatprep.mubr.f32.mxu0 0.0
  %389 = vmatmul.mubr.f32.gmra.mrb[0].mxu0 %v261
  %v390 = vpop.f32.mrb[0].mxu0
  %v391 = vadd.f32 %v292, %v390
  %v392 = vpop.f32.mrb[0].mxu0
  %393 = vmatprep.mubr.f32.mxu0 0.0
  %394 = vmatmul.mubr.f32.gmra.mrb[0].mxu0 %v262
  %v395 = vpop.f32.mrb[0].mxu0
  %v396 = vadd.f32 %v292, %v395
  %v397 = vpop.f32.mrb[0].mxu0
  %398 = vmatprep.mubr.f32.mxu0 0.0
  %399 = vmatmul.mubr.f32.gmra.mrb[0].mxu0 %v263
  %v400 = vpop.f32.mrb[0].mxu0
  %v401 = vadd.f32 %v292, %v400
  %v402 = vpop.f32.mrb[0].mxu0
  %403 = vmatprep.mubr.f32.mxu0 0.0
  %404 = vmatmul.mubr.f32.gmra.mrb[0].mxu0 %v264
  %v405 = vpop.f32.mrb[0].mxu0
  %v406 = vadd.f32 %v292, %v405
  %v407 = vpop.f32.mrb[0].mxu0
  %408 = vmatprep.mubr.f32.mxu0 0.0
  %409 = vmatmul.mubr.f32.gmra.mrb[0].mxu0 %v265
  %v410 = vpop.f32.mrb[0].mxu0
  %v411 = vadd.f32 %v292, %v410
  %v412 = vpop.f32.mrb[0].mxu0
  %413 = vmatprep.mubr.f32.mxu0 0.0
  %414 = vmatmul.mubr.f32.gmra.mrb[0].mxu0 %v266
  %v415 = vpop.f32.mrb[0].mxu0
  %v416 = vadd.f32 %v292, %v415
  %v417 = vpop.f32.mrb[0].mxu0
  %418 = vmatprep.mubr.f32.mxu0 0.0
  %419 = vmatmul.mubr.f32.gmra.mrb[0].mxu0 %v267
  %v420 = vpop.f32.mrb[0].mxu0
  %v421 = vadd.f32 %v292, %v420
  %v422 = vpop.f32.mrb[0].mxu0
  %423 = vmatprep.mubr.f32.mxu0 0.0
  %424 = vmatmul.mubr.f32.gmra.mrb[0].mxu0 %v268
  %v425 = vpop.f32.mrb[0].mxu0
  %v426 = vadd.f32 %v292, %v425
  %v427 = vpop.f32.mrb[0].mxu0
  %428 = vmatprep.mubr.f32.mxu0 0.0
  %429 = vmatmul.mubr.f32.gmra.mrb[0].mxu0 %v269
  %v430 = vpop.f32.mrb[0].mxu0
  %v431 = vadd.f32 %v292, %v430
  %v432 = vpop.f32.mrb[0].mxu0
  %433 = vmatprep.mubr.f32.mxu0 0.0
  %434 = vmatmul.mubr.f32.gmra.mrb[0].mxu0 %v270
  %v435 = vpop.f32.mrb[0].mxu0
  %v436 = vadd.f32 %v292, %v435
  %v437 = vpop.f32.mrb[0].mxu0
  %438 = vdwg.mxu0
  %v439 = vmax.f32 %v361, 0.0
  %v440 = vmax.f32 %v366, 0.0
  %v441 = vmax.f32 %v371, 0.0
  %v442 = vmax.f32 %v376, 0.0
  %v443 = vmax.f32 %v381, 0.0
  %v444 = vmax.f32 %v386, 0.0
  %v445 = vmax.f32 %v391, 0.0
  %v446 = vmax.f32 %v396, 0.0
  %v447 = vmax.f32 %v401, 0.0
  %v448 = vmax.f32 %v406, 0.0
  %v449 = vmax.f32 %v411, 0.0
  %v450 = vmax.f32 %v416, 0.0
  %v451 = vmax.f32 %v421, 0.0
  %v452 = vmax.f32 %v426, 0.0
  %v453 = vmax.f32 %v431, 0.0
  %v454 = vmax.f32 %v436, 0.0
  %v455 = vld [vmem:[%s5] sm:$0xff]
  %v456 = vld [vmem:[%s5 + $0x8] sm:$0xff]
  %v457 = vld [vmem:[%s5 + $0x10] sm:$0xff]
  %v458 = vld [vmem:[%s5 + $0x18] sm:$0xff]
  %v459 = vld [vmem:[%s6] sm:$0x1]
  %v461 = vlaneseq
  %v462 = vshrl.u32 %v461, 7
  %v463 = vsub.s32 0, %v462
  %v464 = vrot.slane %v459, %v463
  %v467 = vsel %vm61, %v439, 0
  %v470 = vsel %vm61, %v440, 0
  %v473 = vsel %vm61, %v441, 0
  %v476 = vsel %vm61, %v442, 0
  %v479 = vsel %vm61, %v443, 0
  %v482 = vsel %vm61, %v444, 0
  %v485 = vsel %vm61, %v445, 0
  %v488 = vsel %vm61, %v446, 0
  %v491 = vsel %vm61, %v447, 0
  %v494 = vsel %vm61, %v448, 0
  %v497 = vsel %vm61, %v449, 0
  %v500 = vsel %vm61, %v450, 0
  %v503 = vsel %vm61, %v451, 0
  %v506 = vsel %vm61, %v452, 0
  %v509 = vsel %vm61, %v453, 0
  %v512 = vsel %vm61, %v454, 0
  %514 = vmatprep.subr.mxu0 0.0
  %515 = vmatpush1.msra.mxu0 %v455
  %516 = vmatprep.subr.mxu0 0.0
  %517 = vmatpush1.msra.mxu0 %v456
  %518 = vmatprep.subr.mxu0 0.0
  %519 = vmatpush1.msra.mxu0 %v457
  %520 = vmatprep.subr.mxu0 0.0
  %521 = vmatpush1.msra.mxu0 %v458
  %522 = vmatprep.subr.mxu0 0.0
  %523 = vmatpush1.msra.mxu0 0.0
  %524 = vmatprep.subr.mxu0 0.0
  %525 = vmatpush1.msra.mxu0 0.0
  %526 = vmatprep.subr.mxu0 0.0
  %527 = vmatpush1.msra.mxu0 0.0
  %528 = vmatprep.subr.mxu0 0.0
  %529 = vmatpush1.msra.mxu0 0.0
  %530 = vmatprep.subr.mxu0 0.0
  %531 = vmatpush1.msra.mxu0 0.0
  %532 = vmatprep.subr.mxu0 0.0
  %533 = vmatpush1.msra.mxu0 0.0
  %534 = vmatprep.subr.mxu0 0.0
  %535 = vmatpush1.msra.mxu0 0.0
  %536 = vmatprep.subr.mxu0 0.0
  %537 = vmatpush1.msra.mxu0 0.0
  %538 = vmatprep.subr.mxu0 0.0
  %539 = vmatpush1.msra.mxu0 0.0
  %540 = vmatprep.subr.mxu0 0.0
  %541 = vmatpush1.msra.mxu0 0.0
  %542 = vmatprep.subr.mxu0 0.0
  %543 = vmatpush1.msra.mxu0 0.0
  %544 = vmatprep.subr.mxu0 0.0
  %545 = vmatpush1.msra.mxu0 0.0
  %546 = vmatprep.subr.mxu0 0.0
  %547 = vmatpush1.msra.mxu0 0.0
  %548 = vmatprep.subr.mxu0 0.0
  %549 = vmatpush1.msra.mxu0 0.0
  %550 = vmatprep.subr.mxu0 0.0
  %551 = vmatpush1.msra.mxu0 0.0
  %552 = vmatprep.subr.mxu0 0.0
  %553 = vmatpush1.msra.mxu0 0.0
  %554 = vmatprep.subr.mxu0 0.0
  %555 = vmatpush1.msra.mxu0 0.0
  %556 = vmatprep.subr.mxu0 0.0
  %557 = vmatpush1.msra.mxu0 0.0
  %558 = vmatprep.subr.mxu0 0.0
  %559 = vmatpush1.msra.mxu0 0.0
  %560 = vmatprep.subr.mxu0 0.0
  %561 = vmatpush1.msra.mxu0 0.0
  %562 = vmatprep.subr.mxu0 0.0
  %563 = vmatpush1.msra.mxu0 0.0
  %564 = vmatprep.subr.mxu0 0.0
  %565 = vmatpush1.msra.mxu0 0.0
  %566 = vmatprep.subr.mxu0 0.0
  %567 = vmatpush1.msra.mxu0 0.0
  %568 = vmatprep.subr.mxu0 0.0
  %569 = vmatpush1.msra.mxu0 0.0
  %570 = vmatprep.subr.mxu0 0.0
  %571 = vmatpush1.msra.mxu0 0.0
  %572 = vmatprep.subr.mxu0 0.0
  %573 = vmatpush1.msra.mxu0 0.0
  %574 = vmatprep.subr.mxu0 0.0
  %575 = vmatpush1.msra.mxu0 0.0
  %576 = vmatprep.subr.mxu0 0.0
  %577 = vmatpush1.msra.mxu0 0.0
  %578 = vmatprep.mubr.f32.mxu0 0.0
  %579 = vmatmul.mubr.f32.gmra.mrb[0].mxu0 %v467
  %v580 = vpop.f32.mrb[0].mxu0
  %v581 = vadd.f32 %v464, %v580
  %v582 = vpop.f32.mrb[0].mxu0
  %583 = vmatprep.mubr.f32.mxu0 0.0
  %584 = vmatmul.mubr.f32.gmra.mrb[0].mxu0 %v470
  %v585 = vpop.f32.mrb[0].mxu0
  %v586 = vadd.f32 %v464, %v585
  %v587 = vpop.f32.mrb[0].mxu0
  %588 = vmatprep.mubr.f32.mxu0 0.0
  %589 = vmatmul.mubr.f32.gmra.mrb[0].mxu0 %v473
  %v590 = vpop.f32.mrb[0].mxu0
  %v591 = vadd.f32 %v464, %v590
  %v592 = vpop.f32.mrb[0].mxu0
  %593 = vmatprep.mubr.f32.mxu0 0.0
  %594 = vmatmul.mubr.f32.gmra.mrb[0].mxu0 %v476
  %v595 = vpop.f32.mrb[0].mxu0
  %v596 = vadd.f32 %v464, %v595
  %v597 = vpop.f32.mrb[0].mxu0
  %598 = vmatprep.mubr.f32.mxu0 0.0
  %599 = vmatmul.mubr.f32.gmra.mrb[0].mxu0 %v479
  %v600 = vpop.f32.mrb[0].mxu0
  %v601 = vadd.f32 %v464, %v600
  %v602 = vpop.f32.mrb[0].mxu0
  %603 = vmatprep.mubr.f32.mxu0 0.0
  %604 = vmatmul.mubr.f32.gmra.mrb[0].mxu0 %v482
  %v605 = vpop.f32.mrb[0].mxu0
  %v606 = vadd.f32 %v464, %v605
  %v607 = vpop.f32.mrb[0].mxu0
  %608 = vmatprep.mubr.f32.mxu0 0.0
  %609 = vmatmul.mubr.f32.gmra.mrb[0].mxu0 %v485
  %v610 = vpop.f32.mrb[0].mxu0
  %v611 = vadd.f32 %v464, %v610
  %v612 = vpop.f32.mrb[0].mxu0
  %613 = vmatprep.mubr.f32.mxu0 0.0
  %614 = vmatmul.mubr.f32.gmra.mrb[0].mxu0 %v488
  %v615 = vpop.f32.mrb[0].mxu0
  %v616 = vadd.f32 %v464, %v615
  %v617 = vpop.f32.mrb[0].mxu0
  %618 = vmatprep.mubr.f32.mxu0 0.0
  %619 = vmatmul.mubr.f32.gmra.mrb[0].mxu0 %v491
  %v620 = vpop.f32.mrb[0].mxu0
  %v621 = vadd.f32 %v464, %v620
  %v622 = vpop.f32.mrb[0].mxu0
  %623 = vmatprep.mubr.f32.mxu0 0.0
  %624 = vmatmul.mubr.f32.gmra.mrb[0].mxu0 %v494
  %v625 = vpop.f32.mrb[0].mxu0
  %v626 = vadd.f32 %v464, %v625
  %v627 = vpop.f32.mrb[0].mxu0
  %628 = vmatprep.mubr.f32.mxu0 0.0
  %629 = vmatmul.mubr.f32.gmra.mrb[0].mxu0 %v497
  %v630 = vpop.f32.mrb[0].mxu0
  %v631 = vadd.f32 %v464, %v630
  %v632 = vpop.f32.mrb[0].mxu0
  %633 = vmatprep.mubr.f32.mxu0 0.0
  %634 = vmatmul.mubr.f32.gmra.mrb[0].mxu0 %v500
  %v635 = vpop.f32.mrb[0].mxu0
  %v636 = vadd.f32 %v464, %v635
  %v637 = vpop.f32.mrb[0].mxu0
  %638 = vmatprep.mubr.f32.mxu0 0.0
  %639 = vmatmul.mubr.f32.gmra.mrb[0].mxu0 %v503
  %v640 = vpop.f32.mrb[0].mxu0
  %v641 = vadd.f32 %v464, %v640
  %v642 = vpop.f32.mrb[0].mxu0
  %643 = vmatprep.mubr.f32.mxu0 0.0
  %644 = vmatmul.mubr.f32.gmra.mrb[0].mxu0 %v506
  %v645 = vpop.f32.mrb[0].mxu0
  %v646 = vadd.f32 %v464, %v645
  %v647 = vpop.f32.mrb[0].mxu0
  %648 = vmatprep.mubr.f32.mxu0 0.0
  %649 = vmatmul.mubr.f32.gmra.mrb[0].mxu0 %v509
  %v650 = vpop.f32.mrb[0].mxu0
  %v651 = vadd.f32 %v464, %v650
  %v652 = vpop.f32.mrb[0].mxu0
  %653 = vmatprep.mubr.f32.mxu0 0.0
  %654 = vmatmul.mubr.f32.gmra.mrb[0].mxu0 %v512
  %v655 = vpop.f32.mrb[0].mxu0
  %v656 = vadd.f32 %v464, %v655
  %v657 = vpop.f32.mrb[0].mxu0
  %658 = vdwg.mxu0
  %v659 = vmax.f32 %v581, 0.0
  %v660 = vmax.f32 %v586, 0.0
  %v661 = vmax.f32 %v591, 0.0
  %v662 = vmax.f32 %v596, 0.0
  %v663 = vmax.f32 %v601, 0.0
  %v664 = vmax.f32 %v606, 0.0
  %v665 = vmax.f32 %v611, 0.0
  %v666 = vmax.f32 %v616, 0.0
  %v667 = vmax.f32 %v621, 0.0
  %v668 = vmax.f32 %v626, 0.0
  %v669 = vmax.f32 %v631, 0.0
  %v670 = vmax.f32 %v636, 0.0
  %v671 = vmax.f32 %v641, 0.0
  %v672 = vmax.f32 %v646, 0.0
  %v673 = vmax.f32 %v651, 0.0
  %v674 = vmax.f32 %v656, 0.0
  %v675 = vld [vmem:[%s7] sm:$0x1]
  %v677 = vlaneseq
  %v678 = vshrl.u32 %v677, 7
  %v679 = vsub.s32 0, %v678
  %v680 = vrot.slane %v675, %v679
  %v682 = vmul.f32 %v659, %v680
  %v683 = vmul.f32 %v660, %v680
  %v684 = vmul.f32 %v661, %v680
  %v685 = vmul.f32 %v662, %v680
  %v686 = vmul.f32 %v663, %v680
  %v687 = vmul.f32 %v664, %v680
  %v688 = vmul.f32 %v665, %v680
  %v689 = vmul.f32 %v666, %v680
  %v690 = vmul.f32 %v667, %v680
  %v691 = vmul.f32 %v668, %v680
  %v692 = vmul.f32 %v669, %v680
  %v693 = vmul.f32 %v670, %v680
  %v694 = vmul.f32 %v671, %v680
  %v695 = vmul.f32 %v672, %v680
  %v696 = vmul.f32 %v673, %v680
  %v697 = vmul.f32 %v674, %v680
  %vm698 = vcmask 64512
  %v699 = vsel %vm698, %v682, 0.0
  %700 = vadd.xlane.f32.xlu0 %v699
  %v701 = vpop.xlane.xlu0 %700
  %v702 = vsel %vm698, %v683, 0.0
  %703 = vadd.xlane.f32.xlu0 %v702
  %v704 = vpop.xlane.xlu0 %703
  %v705 = vsel %vm698, %v684, 0.0
  %706 = vadd.xlane.f32.xlu0 %v705
  %v707 = vpop.xlane.xlu0 %706
  %v708 = vsel %vm698, %v685, 0.0
  %709 = vadd.xlane.f32.xlu0 %v708
  %v710 = vpop.xlane.xlu0 %709
  %v711 = vsel %vm698, %v686, 0.0
  %712 = vadd.xlane.f32.xlu0 %v711
  %v713 = vpop.xlane.xlu0 %712
  %v714 = vsel %vm698, %v687, 0.0
  %715 = vadd.xlane.f32.xlu0 %v714
  %v716 = vpop.xlane.xlu0 %715
  %v717 = vsel %vm698, %v688, 0.0
  %718 = vadd.xlane.f32.xlu0 %v717
  %v719 = vpop.xlane.xlu0 %718
  %v720 = vsel %vm698, %v689, 0.0
  %721 = vadd.xlane.f32.xlu0 %v720
  %v722 = vpop.xlane.xlu0 %721
  %v723 = vsel %vm698, %v690, 0.0
  %724 = vadd.xlane.f32.xlu0 %v723
  %v725 = vpop.xlane.xlu0 %724
  %v726 = vsel %vm698, %v691, 0.0
  %727 = vadd.xlane.f32.xlu0 %v726
  %v728 = vpop.xlane.xlu0 %727
  %v729 = vsel %vm698, %v692, 0.0
  %730 = vadd.xlane.f32.xlu0 %v729
  %v731 = vpop.xlane.xlu0 %730
  %v732 = vsel %vm698, %v693, 0.0
  %733 = vadd.xlane.f32.xlu0 %v732
  %v734 = vpop.xlane.xlu0 %733
  %v735 = vsel %vm698, %v694, 0.0
  %736 = vadd.xlane.f32.xlu0 %v735
  %v737 = vpop.xlane.xlu0 %736
  %v738 = vsel %vm698, %v695, 0.0
  %739 = vadd.xlane.f32.xlu0 %v738
  %v740 = vpop.xlane.xlu0 %739
  %v741 = vsel %vm698, %v696, 0.0
  %742 = vadd.xlane.f32.xlu0 %v741
  %v743 = vpop.xlane.xlu0 %742
  %v744 = vsel %vm698, %v697, 0.0
  %745 = vadd.xlane.f32.xlu0 %v744
  %v746 = vpop.xlane.xlu0 %745
  %v747 = vld [vmem:[#allocation2] sm:$0x1]
  %v749 = vlaneseq
  %v750 = vshrl.u32 %v749, 7
  %v751 = vsub.s32 0, %v750
  %v752 = vrot.slane %v747, %v751
  %v754 = vadd.f32 %v701, %v752
  %v755 = vadd.f32 %v704, %v752
  %v756 = vadd.f32 %v707, %v752
  %v757 = vadd.f32 %v710, %v752
  %v758 = vadd.f32 %v713, %v752
  %v759 = vadd.f32 %v716, %v752
  %v760 = vadd.f32 %v719, %v752
  %v761 = vadd.f32 %v722, %v752
  %v762 = vadd.f32 %v725, %v752
  %v763 = vadd.f32 %v728, %v752
  %v764 = vadd.f32 %v731, %v752
  %v765 = vadd.f32 %v734, %v752
  %v766 = vadd.f32 %v737, %v752
  %v767 = vadd.f32 %v740, %v752
  %v768 = vadd.f32 %v743, %v752
  %v769 = vadd.f32 %v746, %v752
  %vm770 = vcmask 7168
  %771 = vst.msk [vmem:[%s9] sm:$0xff] %vm770, %v754
  %772 = vst.msk [vmem:[%s9 + $0x8] sm:$0xff] %vm770, %v755
  %773 = vst.msk [vmem:[%s9 + $0x10] sm:$0xff] %vm770, %v756
  %774 = vst.msk [vmem:[%s9 + $0x18] sm:$0xff] %vm770, %v757
  %775 = vst.msk [vmem:[%s9 + $0x20] sm:$0xff] %vm770, %v758
  %776 = vst.msk [vmem:[%s9 + $0x28] sm:$0xff] %vm770, %v759
  %777 = vst.msk [vmem:[%s9 + $0x30] sm:$0xff] %vm770, %v760
  %778 = vst.msk [vmem:[%s9 + $0x38] sm:$0xff] %vm770, %v761
  %779 = vst.msk [vmem:[%s9 + $0x40] sm:$0xff] %vm770, %v762
  %780 = vst.msk [vmem:[%s9 + $0x48] sm:$0xff] %vm770, %v763
  %781 = vst.msk [vmem:[%s9 + $0x50] sm:$0xff] %vm770, %v764
  %782 = vst.msk [vmem:[%s9 + $0x58] sm:$0xff] %vm770, %v765
  %783 = vst.msk [vmem:[%s9 + $0x60] sm:$0xff] %vm770, %v766
  %784 = vst.msk [vmem:[%s9 + $0x68] sm:$0xff] %vm770, %v767
  %785 = vst.msk [vmem:[%s9 + $0x70] sm:$0xff] %vm770, %v768
  %786 = vst.msk [vmem:[%s9 + $0x78] sm:$0xff] %vm770, %v769
  // Predicated region
  $region38: #{tpu_custom_call.1} parent=0 // pred_check
    _
  $region39: #{tpu_custom_call.1} parent=0 // pred_check_branch
    %788 = sbr.rel (0) target = $region41
  $region40: #{tpu_custom_call.1} parent=0 // pred_region
    _
  $region41: #{tpu_custom_call.1} parent=0 // pred_fallthru
    _
  // Predicated region
  $region42: #{tpu_custom_call.1} parent=0 // pred_check
    _
  $region43: #{tpu_custom_call.1} parent=0 // pred_check_branch
    %790 = sbr.rel (0) target = $region45
  $region44: #{tpu_custom_call.1} parent=0 // pred_region
    _
  $region45: #{tpu_custom_call.1} parent=0 // pred_fallthru
    _

</llo_original>
